<compile_context>
chip_gen: v5e
topology: v5e:2x2
jax: 0.10.0
libtpu: 0.0.40
codegen_flags: <defaults>
</compile_context>

<pallas_src>
import jax
import jax.numpy as jnp
from jax.experimental import pallas as pl
from jax.experimental.pallas import tpu as pltpu

LANE = 128


def alunet_kernel(xt_ref, w1_ref, b1_ref, w2_ref, b2_ref, ot_ref):
    # Lane-dense layout: batch on the 128-lane axis.
    #   xt_ref: (6, bb)   w1_ref: (H, 6)  b1_ref: (H, 1)
    #   w2_ref: (2, H)    b2_ref: (2, 1)  ot_ref: (2, bb)
    xt = xt_ref[...]
    w1 = w1_ref[...]
    w2 = w2_ref[...]
    K = xt_ref.shape[0]          # 6 input features
    H = w1_ref.shape[0]          # hidden size

    # fc1 + bias: K unrolled VPU outer-product FMAs (no MXU for these shapes).
    h = b1_ref[...]              # (H, 1), broadcasts over the batch lanes
    for k in range(K):
        h = h + w1[:, k:k + 1] * xt[k:k + 1, :]
    h = jnp.maximum(h, 0.0)      # ReLU

    # fc2 + bias: H unrolled VPU FMAs.
    out = b2_ref[...]            # (2, 1)
    for j in range(H):
        out = out + w2[:, j:j + 1] * h[j:j + 1, :]

    ot_ref[...] = out.astype(ot_ref.dtype)


def alunet_forward(x, w1, b1, w2, b2, *, block_b=1024):
    """ALUNet forward.

    x:  (B, 6) float32
    w1: (H, 6), b1: (H,)   -- PyTorch nn.Linear layout (out_features, in_features)
    w2: (2, H), b2: (2,)
    Returns (B, 2) float32.
    """
    assert block_b % LANE == 0
    B, K = x.shape
    H = w1.shape[0]
    O = w2.shape[0]

    # Lane-dense layout: put batch on lanes, pad it to whole 128-aligned blocks.
    xt = x.astype(jnp.float32).T                      # (6, B)
    bb = min(block_b, LANE * pl.cdiv(B, LANE))        # block size (multiple of 128)
    Bp = bb * pl.cdiv(B, bb)                          # padded batch
    if Bp != B:
        xt = jnp.pad(xt, ((0, 0), (0, Bp - B)))

    b1c = b1.reshape(H, 1).astype(jnp.float32)
    b2c = b2.reshape(O, 1).astype(jnp.float32)

    ot = pl.pallas_call(
        alunet_kernel,
        out_shape=jax.ShapeDtypeStruct((O, Bp), jnp.float32),
        grid=(Bp // bb,),
        in_specs=[
            pl.BlockSpec((K, bb), lambda i: (0, i)),   # x streams over the batch grid
            pl.BlockSpec((H, K), lambda i: (0, 0)),    # weights/biases: constant block
            pl.BlockSpec((H, 1), lambda i: (0, 0)),    #   index -> stay VMEM-resident
            pl.BlockSpec((O, H), lambda i: (0, 0)),
            pl.BlockSpec((O, 1), lambda i: (0, 0)),
        ],
        out_specs=pl.BlockSpec((O, bb), lambda i: (0, i)),
        compiler_params=pltpu.CompilerParams(
            dimension_semantics=("parallel",)),        # megacore sharding on v7x
    )(xt, w1.astype(jnp.float32), b1c, w2.astype(jnp.float32), b2c)

    return ot[:, :B].T                                 # back to (B, 2)


def init_params(key, hidden_size=8):
    """Deterministic init mimicking nn.Linear's uniform(-1/sqrt(fan_in), +...)."""
    k1, k2, k3, k4 = jax.random.split(key, 4)
    bound1 = 1.0 / jnp.sqrt(jnp.float32(6))
    bound2 = 1.0 / jnp.sqrt(jnp.float32(hidden_size))
    # PyTorch layout: weight (out_features, in_features).
    w1 = jax.random.uniform(k1, (hidden_size, 6), jnp.float32, -bound1, bound1)
    b1 = jax.random.uniform(k2, (hidden_size,), jnp.float32, -bound1, bound1)
    w2 = jax.random.uniform(k3, (2, hidden_size), jnp.float32, -bound2, bound2)
    b2 = jax.random.uniform(k4, (2,), jnp.float32, -bound2, bound2)
    return w1, b1, w2, b2


def reference_forward(x, w1, b1, w2, b2):
    h = jnp.maximum(x @ w1.T + b1, 0.0)
    return h @ w2.T + b2


if __name__ == "__main__":
    key = jax.random.PRNGKey(0)
    k_x, k_x2, k_p = jax.random.split(key, 3)

    hidden_size = 8
    w1, b1, w2, b2 = init_params(k_p, hidden_size)

    # Small batch (matches the 2-bit-ALU training shapes): 6 input bits.
    batch = 8
    x = jax.random.bernoulli(k_x, 0.5, (batch, 6)).astype(jnp.float32)
    out = jax.block_until_ready(alunet_forward(x, w1, b1, w2, b2))
    ref = reference_forward(x, w1, b1, w2, b2)
    assert out.shape == (batch, 2)
    assert jnp.allclose(out, ref, atol=1e-5, rtol=1e-5), "mismatch vs reference (small)"

    # Non-multiple-of-128 batch to exercise padding + a multi-step batch grid
    # with VMEM-resident weights.
    x2 = jax.random.bernoulli(k_x2, 0.5, (260, 6)).astype(jnp.float32)
    out2 = jax.block_until_ready(alunet_forward(x2, w1, b1, w2, b2, block_b=128))
    ref2 = reference_forward(x2, w1, b1, w2, b2)
    assert out2.shape == (260, 2)
    assert jnp.allclose(out2, ref2, atol=1e-5, rtol=1e-5), "mismatch vs reference (grid)"

    print("KERNEL_OK")
</pallas_src>

<mosaic_0001>
module attributes {stable_mosaic.version = 11 : i64} {
  func.func @alunet_kernel(%arg0: i32, %arg1: memref<6x128xf32, #tpu.memory_space<vmem>>, %arg2: memref<8x6xf32, #tpu.memory_space<vmem>>, %arg3: memref<8x1xf32, #tpu.memory_space<vmem>>, %arg4: memref<2x8xf32, #tpu.memory_space<vmem>>, %arg5: memref<2x1xf32, #tpu.memory_space<vmem>>, %arg6: memref<2x128xf32, #tpu.memory_space<vmem>>) attributes {dimension_semantics = [#tpu.dimension_semantics<parallel>], iteration_bounds = array<i64: 1>, scalar_prefetch = 0 : i64, scratch_operands = 0 : i64, tpu.core_type = #tpu.core_type<tc>, window_params = [{transform_indices = @transform_0, window_bounds = array<i64: 6, 128>}, {pipeline_mode = #tpu.pipeline_mode<synchronous>, transform_indices = @transform_1, window_bounds = array<i64: 8, 6>}, {pipeline_mode = #tpu.pipeline_mode<synchronous>, transform_indices = @transform_2, window_bounds = array<i64: 8, 1>}, {pipeline_mode = #tpu.pipeline_mode<synchronous>, transform_indices = @transform_3, window_bounds = array<i64: 2, 8>}, {pipeline_mode = #tpu.pipeline_mode<synchronous>, transform_indices = @transform_4, window_bounds = array<i64: 2, 1>}, {transform_indices = @transform_5, window_bounds = array<i64: 2, 128>}]} {
    %c0 = arith.constant 0 : index
    %c0_0 = arith.constant 0 : index
    %0 = vector.load %arg1[%c0, %c0_0] : memref<6x128xf32, #tpu.memory_space<vmem>>, vector<6x128xf32>
    %c0_1 = arith.constant 0 : index
    %c0_2 = arith.constant 0 : index
    %1 = vector.load %arg2[%c0_1, %c0_2] : memref<8x6xf32, #tpu.memory_space<vmem>>, vector<8x6xf32>
    %c0_3 = arith.constant 0 : index
    %c0_4 = arith.constant 0 : index
    %2 = vector.load %arg4[%c0_3, %c0_4] : memref<2x8xf32, #tpu.memory_space<vmem>>, vector<2x8xf32>
    %c0_5 = arith.constant 0 : index
    %c0_6 = arith.constant 0 : index
    %3 = vector.load %arg3[%c0_5, %c0_6] : memref<8x1xf32, #tpu.memory_space<vmem>>, vector<8x1xf32>
    %4 = vector.extract_strided_slice %1 {offsets = [0, 0], sizes = [8, 1], strides = [1, 1]} : vector<8x6xf32> to vector<8x1xf32>
    %5 = vector.extract_strided_slice %0 {offsets = [0, 0], sizes = [1, 128], strides = [1, 1]} : vector<6x128xf32> to vector<1x128xf32>
    %6 = vector.broadcast %4 : vector<8x1xf32> to vector<8x128xf32>
    %7 = vector.broadcast %5 : vector<1x128xf32> to vector<8x128xf32>
    %8 = arith.mulf %6, %7 : vector<8x128xf32>
    %9 = vector.broadcast %3 : vector<8x1xf32> to vector<8x128xf32>
    %10 = arith.addf %9, %8 : vector<8x128xf32>
    %11 = vector.extract_strided_slice %1 {offsets = [0, 1], sizes = [8, 1], strides = [1, 1]} : vector<8x6xf32> to vector<8x1xf32>
    %12 = vector.extract_strided_slice %0 {offsets = [1, 0], sizes = [1, 128], strides = [1, 1]} : vector<6x128xf32> to vector<1x128xf32>
    %13 = vector.broadcast %11 : vector<8x1xf32> to vector<8x128xf32>
    %14 = vector.broadcast %12 : vector<1x128xf32> to vector<8x128xf32>
    %15 = arith.mulf %13, %14 : vector<8x128xf32>
    %16 = arith.addf %10, %15 : vector<8x128xf32>
    %17 = vector.extract_strided_slice %1 {offsets = [0, 2], sizes = [8, 1], strides = [1, 1]} : vector<8x6xf32> to vector<8x1xf32>
    %18 = vector.extract_strided_slice %0 {offsets = [2, 0], sizes = [1, 128], strides = [1, 1]} : vector<6x128xf32> to vector<1x128xf32>
    %19 = vector.broadcast %17 : vector<8x1xf32> to vector<8x128xf32>
    %20 = vector.broadcast %18 : vector<1x128xf32> to vector<8x128xf32>
    %21 = arith.mulf %19, %20 : vector<8x128xf32>
    %22 = arith.addf %16, %21 : vector<8x128xf32>
    %23 = vector.extract_strided_slice %1 {offsets = [0, 3], sizes = [8, 1], strides = [1, 1]} : vector<8x6xf32> to vector<8x1xf32>
    %24 = vector.extract_strided_slice %0 {offsets = [3, 0], sizes = [1, 128], strides = [1, 1]} : vector<6x128xf32> to vector<1x128xf32>
    %25 = vector.broadcast %23 : vector<8x1xf32> to vector<8x128xf32>
    %26 = vector.broadcast %24 : vector<1x128xf32> to vector<8x128xf32>
    %27 = arith.mulf %25, %26 : vector<8x128xf32>
    %28 = arith.addf %22, %27 : vector<8x128xf32>
    %29 = vector.extract_strided_slice %1 {offsets = [0, 4], sizes = [8, 1], strides = [1, 1]} : vector<8x6xf32> to vector<8x1xf32>
    %30 = vector.extract_strided_slice %0 {offsets = [4, 0], sizes = [1, 128], strides = [1, 1]} : vector<6x128xf32> to vector<1x128xf32>
    %31 = vector.broadcast %29 : vector<8x1xf32> to vector<8x128xf32>
    %32 = vector.broadcast %30 : vector<1x128xf32> to vector<8x128xf32>
    %33 = arith.mulf %31, %32 : vector<8x128xf32>
    %34 = arith.addf %28, %33 : vector<8x128xf32>
    %35 = vector.extract_strided_slice %1 {offsets = [0, 5], sizes = [8, 1], strides = [1, 1]} : vector<8x6xf32> to vector<8x1xf32>
    %36 = vector.extract_strided_slice %0 {offsets = [5, 0], sizes = [1, 128], strides = [1, 1]} : vector<6x128xf32> to vector<1x128xf32>
    %37 = vector.broadcast %35 : vector<8x1xf32> to vector<8x128xf32>
    %38 = vector.broadcast %36 : vector<1x128xf32> to vector<8x128xf32>
    %39 = arith.mulf %37, %38 : vector<8x128xf32>
    %40 = arith.addf %34, %39 : vector<8x128xf32>
    %cst = arith.constant 0.000000e+00 : f32
    %41 = vector.broadcast %cst : f32 to vector<8x128xf32>
    %42 = arith.maximumf %40, %41 : vector<8x128xf32>
    %c0_7 = arith.constant 0 : index
    %c0_8 = arith.constant 0 : index
    %43 = vector.load %arg5[%c0_7, %c0_8] : memref<2x1xf32, #tpu.memory_space<vmem>>, vector<2x1xf32>
    %44 = vector.extract_strided_slice %2 {offsets = [0, 0], sizes = [2, 1], strides = [1, 1]} : vector<2x8xf32> to vector<2x1xf32>
    %45 = vector.extract_strided_slice %42 {offsets = [0, 0], sizes = [1, 128], strides = [1, 1]} : vector<8x128xf32> to vector<1x128xf32>
    %46 = vector.broadcast %44 : vector<2x1xf32> to vector<2x128xf32>
    %47 = vector.broadcast %45 : vector<1x128xf32> to vector<2x128xf32>
    %48 = arith.mulf %46, %47 : vector<2x128xf32>
    %49 = vector.broadcast %43 : vector<2x1xf32> to vector<2x128xf32>
    %50 = arith.addf %49, %48 : vector<2x128xf32>
    %51 = vector.extract_strided_slice %2 {offsets = [0, 1], sizes = [2, 1], strides = [1, 1]} : vector<2x8xf32> to vector<2x1xf32>
    %52 = vector.extract_strided_slice %42 {offsets = [1, 0], sizes = [1, 128], strides = [1, 1]} : vector<8x128xf32> to vector<1x128xf32>
    %53 = vector.broadcast %51 : vector<2x1xf32> to vector<2x128xf32>
    %54 = vector.broadcast %52 : vector<1x128xf32> to vector<2x128xf32>
    %55 = arith.mulf %53, %54 : vector<2x128xf32>
    %56 = arith.addf %50, %55 : vector<2x128xf32>
    %57 = vector.extract_strided_slice %2 {offsets = [0, 2], sizes = [2, 1], strides = [1, 1]} : vector<2x8xf32> to vector<2x1xf32>
    %58 = vector.extract_strided_slice %42 {offsets = [2, 0], sizes = [1, 128], strides = [1, 1]} : vector<8x128xf32> to vector<1x128xf32>
    %59 = vector.broadcast %57 : vector<2x1xf32> to vector<2x128xf32>
    %60 = vector.broadcast %58 : vector<1x128xf32> to vector<2x128xf32>
    %61 = arith.mulf %59, %60 : vector<2x128xf32>
    %62 = arith.addf %56, %61 : vector<2x128xf32>
    %63 = vector.extract_strided_slice %2 {offsets = [0, 3], sizes = [2, 1], strides = [1, 1]} : vector<2x8xf32> to vector<2x1xf32>
    %64 = vector.extract_strided_slice %42 {offsets = [3, 0], sizes = [1, 128], strides = [1, 1]} : vector<8x128xf32> to vector<1x128xf32>
    %65 = vector.broadcast %63 : vector<2x1xf32> to vector<2x128xf32>
    %66 = vector.broadcast %64 : vector<1x128xf32> to vector<2x128xf32>
    %67 = arith.mulf %65, %66 : vector<2x128xf32>
    %68 = arith.addf %62, %67 : vector<2x128xf32>
    %69 = vector.extract_strided_slice %2 {offsets = [0, 4], sizes = [2, 1], strides = [1, 1]} : vector<2x8xf32> to vector<2x1xf32>
    %70 = vector.extract_strided_slice %42 {offsets = [4, 0], sizes = [1, 128], strides = [1, 1]} : vector<8x128xf32> to vector<1x128xf32>
    %71 = vector.broadcast %69 : vector<2x1xf32> to vector<2x128xf32>
    %72 = vector.broadcast %70 : vector<1x128xf32> to vector<2x128xf32>
    %73 = arith.mulf %71, %72 : vector<2x128xf32>
    %74 = arith.addf %68, %73 : vector<2x128xf32>
    %75 = vector.extract_strided_slice %2 {offsets = [0, 5], sizes = [2, 1], strides = [1, 1]} : vector<2x8xf32> to vector<2x1xf32>
    %76 = vector.extract_strided_slice %42 {offsets = [5, 0], sizes = [1, 128], strides = [1, 1]} : vector<8x128xf32> to vector<1x128xf32>
    %77 = vector.broadcast %75 : vector<2x1xf32> to vector<2x128xf32>
    %78 = vector.broadcast %76 : vector<1x128xf32> to vector<2x128xf32>
    %79 = arith.mulf %77, %78 : vector<2x128xf32>
    %80 = arith.addf %74, %79 : vector<2x128xf32>
    %81 = vector.extract_strided_slice %2 {offsets = [0, 6], sizes = [2, 1], strides = [1, 1]} : vector<2x8xf32> to vector<2x1xf32>
    %82 = vector.extract_strided_slice %42 {offsets = [6, 0], sizes = [1, 128], strides = [1, 1]} : vector<8x128xf32> to vector<1x128xf32>
    %83 = vector.broadcast %81 : vector<2x1xf32> to vector<2x128xf32>
    %84 = vector.broadcast %82 : vector<1x128xf32> to vector<2x128xf32>
    %85 = arith.mulf %83, %84 : vector<2x128xf32>
    %86 = arith.addf %80, %85 : vector<2x128xf32>
    %87 = vector.extract_strided_slice %2 {offsets = [0, 7], sizes = [2, 1], strides = [1, 1]} : vector<2x8xf32> to vector<2x1xf32>
    %88 = vector.extract_strided_slice %42 {offsets = [7, 0], sizes = [1, 128], strides = [1, 1]} : vector<8x128xf32> to vector<1x128xf32>
    %89 = vector.broadcast %87 : vector<2x1xf32> to vector<2x128xf32>
    %90 = vector.broadcast %88 : vector<1x128xf32> to vector<2x128xf32>
    %91 = arith.mulf %89, %90 : vector<2x128xf32>
    %92 = arith.addf %86, %91 : vector<2x128xf32>
    %c0_9 = arith.constant 0 : index
    %c0_10 = arith.constant 0 : index
    %93 = vector.load %arg6[%c0_9, %c0_10] : memref<2x128xf32, #tpu.memory_space<vmem>>, vector<2x128xf32>
    tpu.vector_store %arg6[%c0_9, %c0_10], %92 {strides = array<i32>} : memref<2x128xf32, #tpu.memory_space<vmem>>, vector<2x128xf32>,
    return
  }
  func.func @transform_0(%arg0: i32) -> (i32, i32) {
    %c0_i32 = arith.constant 0 : i32
    %c0_i32_0 = arith.constant 0 : i32
    return %c0_i32, %arg0 : i32, i32
  }
  func.func @transform_1(%arg0: i32) -> (i32, i32) {
    %c0_i32 = arith.constant 0 : i32
    %c0_i32_0 = arith.constant 0 : i32
    %c0_i32_1 = arith.constant 0 : i32
    return %c0_i32, %c0_i32_0 : i32, i32
  }
  func.func @transform_2(%arg0: i32) -> (i32, i32) {
    %c0_i32 = arith.constant 0 : i32
    %c0_i32_0 = arith.constant 0 : i32
    %c0_i32_1 = arith.constant 0 : i32
    return %c0_i32, %c0_i32_0 : i32, i32
  }
  func.func @transform_3(%arg0: i32) -> (i32, i32) {
    %c0_i32 = arith.constant 0 : i32
    %c0_i32_0 = arith.constant 0 : i32
    %c0_i32_1 = arith.constant 0 : i32
    return %c0_i32, %c0_i32_0 : i32, i32
  }
  func.func @transform_4(%arg0: i32) -> (i32, i32) {
    %c0_i32 = arith.constant 0 : i32
    %c0_i32_0 = arith.constant 0 : i32
    %c0_i32_1 = arith.constant 0 : i32
    return %c0_i32, %c0_i32_0 : i32, i32
  }
  func.func @transform_5(%arg0: i32) -> (i32, i32) {
    %c0_i32 = arith.constant 0 : i32
    %c0_i32_0 = arith.constant 0 : i32
    return %c0_i32, %arg0 : i32, i32
  }
}

</mosaic_0001>

<llo_original>
// kernel: tpu_custom_call.1
$region0: #{tpu_custom_call.1}
  #allocation0 [shape = 'u32[]', space=smem, size = 0x4, offset = 0x4, fixed_abs, tag = 'smem constant byte address 0x4 - core index']
  #allocation1 [shape = 'u32[72,128]{1,0:T(1,128)}', space=vmem, size = 0x9000, scoped, tag = 'internal scratch']
  %s0 = inlined_call_operand.vmem [shape: f32[6,128], index: 0, kind: input, shape index: {}]
  %s1 = inlined_call_operand.hbm [shape: f32[8,6], index: 1, kind: input, shape index: {}]
  %s2 = inlined_call_operand.vmem [shape: f32[8,1], index: 2, kind: input, shape index: {}]
  %s3 = inlined_call_operand.vmem [shape: f32[2,8], index: 3, kind: input, shape index: {}]
  %s4 = inlined_call_operand.vmem [shape: f32[2,1], index: 4, kind: input, shape index: {}]
  %s5 = inlined_call_operand.hbm [shape: f32[2,128], index: 5, kind: output, shape index: {}]
  %s6 = sld [smem:[#allocation0]]
  $region34: #{tpu_custom_call.1} parent=0
    _
  %s8 = ssub.s32 1, %s6
  %s9 = scalar_select 0, %s8, %s6
  $region1: #{tpu_custom_call.1} parent=0
    #allocation2 [shape = 'u8[4096]{0}', space=vmem, size = 0x1000, scoped, tag = 'input window, operand 1, single buffered']
    #allocation3 [shape = 's32[1]{0}', space=sflag, size = 0x4, scoped, tag = 'scoped memory for tpu_custom_call.1']
    #allocation4 [shape = 's32[1]{0}', space=sflag, size = 0x4, scoped, tag = 'scoped memory for tpu_custom_call.1']
    #allocation5 [shape = 'u8[1024]{0}', space=vmem, size = 0x400, scoped, tag = 'output window, operand 0, single buffered']
    %10 = vsyncpa [#allocation3], 0
    %11 = vsyncpa [#allocation4], 0
    // Predicated region
    $region2: #{tpu_custom_call.1} parent=1 // pred_check
      _
    $region3: #{tpu_custom_call.1} parent=1 // pred_check_branch
      %13 = sbr.rel (0) target = $region5
    $region4: #{tpu_custom_call.1} parent=1 // pred_region
      _
    $region5: #{tpu_custom_call.1} parent=1 // pred_fallthru
      _
    // Predicated region
    $region6: #{tpu_custom_call.1} parent=1 // pred_check
      _
    $region7: #{tpu_custom_call.1} parent=1 // pred_check_branch
      %15 = sbr.rel (0) target = $region9
    $region8: #{tpu_custom_call.1} parent=1 // pred_region
      %17 = vsyncadd [#allocation3], 0
      %s19 = sshll.u32 %s1, 4
      %s20 = int_to_ptr.hbm [resolvable:$true] %s19
      %s21 = sshll.u32 [#allocation2], 4
      %s22 = int_to_ptr.vmem [resolvable:$true] %s21
      %24 = dma.hbm_to_vmem [thread:$0]  %s20, 128, %s22, [#allocation3]
    $region9: #{tpu_custom_call.1} parent=1 // pred_fallthru
      _
    // Predicated region
    $region10: #{tpu_custom_call.1} parent=1 // pred_check
      _
    $region11: #{tpu_custom_call.1} parent=1 // pred_check_branch
      %26 = sbr.rel (0) target = $region13
    $region12: #{tpu_custom_call.1} parent=1 // pred_region
      _
    $region13: #{tpu_custom_call.1} parent=1 // pred_fallthru
      _
    // Predicated region
    $region14: #{tpu_custom_call.1} parent=1 // pred_check
      _
    $region15: #{tpu_custom_call.1} parent=1 // pred_check_branch
      %28 = sbr.rel (0) target = $region17
    $region16: #{tpu_custom_call.1} parent=1 // pred_region
      _
    $region17: #{tpu_custom_call.1} parent=1 // pred_fallthru
      _
    // Predicated region
    $region18: #{tpu_custom_call.1} parent=1 // pred_check
      _
    $region19: #{tpu_custom_call.1} parent=1 // pred_check_branch
      %30 = sbr.rel (0) target = $region21
    $region20: #{tpu_custom_call.1} parent=1 // pred_region
      _
    $region21: #{tpu_custom_call.1} parent=1 // pred_fallthru
      _
    // Predicated region
    $region22: #{tpu_custom_call.1} parent=1 // pred_check
      _
    $region23: #{tpu_custom_call.1} parent=1 // pred_check_branch
      %32 = sbr.rel (0) target = $region25
    $region24: #{tpu_custom_call.1} parent=1 // pred_region
      %34 = dma.done [#allocation3], 128
    $region25: #{tpu_custom_call.1} parent=1 // pred_fallthru
      _
    %v35 = vld [vmem:[%s0] sm:$0x3f]
    %v36 = vld [vmem:[#allocation2] sm:$0xff]
    %v37 = vld [vmem:[%s3] sm:$0x3]
    %v38 = vld [vmem:[%s2] sm:$0xff]
    %40 = vset.pattern.permute.xlu0 0
    %41 = vperm.xlu0 %40, %v36
    %v42 = vpop.permute.xlu0 %41
    %v44 = vperm.slane %v35, 0
    %v45 = vmul.f32 %v42, %v44
    %47 = vset.pattern.permute.xlu0 0
    %48 = vperm.xlu0 %47, %v38
    %v49 = vpop.permute.xlu0 %48
    %v51 = vadd.f32 %v49, %v45
    %52 = vset.pattern.permute.xlu0 1
    %53 = vperm.xlu0 %52, %v36
    %v54 = vpop.permute.xlu0 %53
    %v56 = vperm.slane %v35, 1
    %v57 = vmul.f32 %v54, %v56
    %v58 = vadd.f32 %v51, %v57
    %59 = vset.pattern.permute.xlu0 2
    %60 = vperm.xlu0 %59, %v36
    %v61 = vpop.permute.xlu0 %60
    %v63 = vperm.slane %v35, 2
    %v64 = vmul.f32 %v61, %v63
    %v65 = vadd.f32 %v58, %v64
    %66 = vset.pattern.permute.xlu0 3
    %67 = vperm.xlu0 %66, %v36
    %v68 = vpop.permute.xlu0 %67
    %v70 = vperm.slane %v35, 3
    %v71 = vmul.f32 %v68, %v70
    %v72 = vadd.f32 %v65, %v71
    %73 = vset.pattern.permute.xlu0 4
    %74 = vperm.xlu0 %73, %v36
    %v75 = vpop.permute.xlu0 %74
    %v77 = vperm.slane %v35, 4
    %v78 = vmul.f32 %v75, %v77
    %v79 = vadd.f32 %v72, %v78
    %80 = vset.pattern.permute.xlu0 5
    %81 = vperm.xlu0 %80, %v36
    %v82 = vpop.permute.xlu0 %81
    %v84 = vperm.slane %v35, 5
    %v85 = vmul.f32 %v82, %v84
    %v86 = vadd.f32 %v79, %v85
    %v87 = vmax.f32 %v86, 0.0
    %v88 = vld [vmem:[%s4] sm:$0x3]
    %90 = vset.pattern.permute.xlu0 0
    %91 = vperm.xlu0 %90, %v37
    %v92 = vpop.permute.xlu0 %91
    %v94 = vperm.slane %v87, 0
    %v95 = vmul.f32 %v92, %v94
    %97 = vset.pattern.permute.xlu0 0
    %98 = vperm.xlu0 %97, %v88
    %v99 = vpop.permute.xlu0 %98
    %v101 = vadd.f32 %v99, %v95
    %102 = vset.pattern.permute.xlu0 1
    %103 = vperm.xlu0 %102, %v37
    %v104 = vpop.permute.xlu0 %103
    %v106 = vperm.slane %v87, 1
    %v107 = vmul.f32 %v104, %v106
    %v108 = vadd.f32 %v101, %v107
    %109 = vset.pattern.permute.xlu0 2
    %110 = vperm.xlu0 %109, %v37
    %v111 = vpop.permute.xlu0 %110
    %v113 = vperm.slane %v87, 2
    %v114 = vmul.f32 %v111, %v113
    %v115 = vadd.f32 %v108, %v114
    %116 = vset.pattern.permute.xlu0 3
    %117 = vperm.xlu0 %116, %v37
    %v118 = vpop.permute.xlu0 %117
    %v120 = vperm.slane %v87, 3
    %v121 = vmul.f32 %v118, %v120
    %v122 = vadd.f32 %v115, %v121
    %123 = vset.pattern.permute.xlu0 4
    %124 = vperm.xlu0 %123, %v37
    %v125 = vpop.permute.xlu0 %124
    %v127 = vperm.slane %v87, 4
    %v128 = vmul.f32 %v125, %v127
    %v129 = vadd.f32 %v122, %v128
    %130 = vset.pattern.permute.xlu0 5
    %131 = vperm.xlu0 %130, %v37
    %v132 = vpop.permute.xlu0 %131
    %v134 = vperm.slane %v87, 5
    %v135 = vmul.f32 %v132, %v134
    %v136 = vadd.f32 %v129, %v135
    %137 = vset.pattern.permute.xlu0 6
    %138 = vperm.xlu0 %137, %v37
    %v139 = vpop.permute.xlu0 %138
    %v141 = vperm.slane %v87, 6
    %v142 = vmul.f32 %v139, %v141
    %v143 = vadd.f32 %v136, %v142
    %144 = vset.pattern.permute.xlu0 7
    %145 = vperm.xlu0 %144, %v37
    %v146 = vpop.permute.xlu0 %145
    %v148 = vperm.slane %v87, 7
    %v149 = vmul.f32 %v146, %v148
    %v150 = vadd.f32 %v143, %v149
    %151 = vst [vmem:[#allocation5] sm:$0x3] %v150
    // Predicated region
    $region26: #{tpu_custom_call.1} parent=1 // pred_check
      _
    $region27: #{tpu_custom_call.1} parent=1 // pred_check_branch
      %153 = sbr.rel (0) target = $region29
    $region28: #{tpu_custom_call.1} parent=1 // pred_region
      %155 = vsyncadd [#allocation4], 0
      %s157 = sshll.u32 [#allocation5], 4
      %s158 = int_to_ptr.vmem [resolvable:$true] %s157
      %s159 = sshll.u32 %s5, 4
      %s160 = int_to_ptr.hbm [resolvable:$true] %s159
      %162 = dma.vmem_to_hbm [thread:$0]  %s158, 32, %s160, [#allocation4]
    $region29: #{tpu_custom_call.1} parent=1 // pred_fallthru
      _
    // Predicated region
    $region30: #{tpu_custom_call.1} parent=1 // pred_check
      _
    $region31: #{tpu_custom_call.1} parent=1 // pred_check_branch
      %164 = sbr.rel (0) target = $region33
    $region32: #{tpu_custom_call.1} parent=1 // pred_region
      %166 = dma.done [#allocation4], 32
    $region33: #{tpu_custom_call.1} parent=1 // pred_fallthru
      _
    %167 = vsyncpa [#allocation3], 1
    %168 = vsyncpa [#allocation4], 1

</llo_original>
